<compile_context>
chip_gen: v5e
topology: v5e:2x2
jax: 0.10.0
libtpu: 0.0.40
codegen_flags: <defaults>
</compile_context>

<pallas_src>
import functools

import jax
import jax.numpy as jnp
from jax.experimental import pallas as pl
from jax.experimental.pallas import tpu as pltpu


_TARGET_BLOCK_BYTES = 4 * 1024 * 1024   # ~4 MiB f32 per block: with in+out blocks
                                        # double-buffered this stays well under
                                        # v7x's 64 MiB VMEM, and amortizes the
                                        # ~0.35 us per-grid-step overhead.
_VMEM_LIMIT_BYTES = 32 * 1024 * 1024


def _round_up(x, m):
    return ((x + m - 1) // m) * m


def _diff_lanes_kernel(x_ref, o_ref, *, inv_2d, n):
    """Circular central diff along the last (lane) axis of a (TILE_R, W) tile."""
    x = x_ref[...].astype(jnp.float32)
    fwd = pltpu.roll(x, n - 1, 1)   # x[..., i+1] (wrapped); positive shift only
    bwd = pltpu.roll(x, 1, 1)       # x[..., i-1] (wrapped)
    o_ref[...] = (fwd - bwd) * inv_2d


def _diff_sublanes_kernel(x_ref, o_ref, *, inv_2d, n):
    """Circular central diff along the first (sublane) axis of an (H, TILE_W) tile."""
    x = x_ref[...].astype(jnp.float32)
    fwd = pltpu.roll(x, n - 1, 0)   # x[i+1, ...] (wrapped)
    bwd = pltpu.roll(x, 1, 0)       # x[i-1, ...] (wrapped)
    o_ref[...] = (fwd - bwd) * inv_2d


def differential_op(inputs, diffx=False, d=1.0):
    """Pallas port of DifferentialOp.forward."""
    unsqueezed = inputs.ndim == 2
    x = inputs[None] if unsqueezed else inputs
    B, H, W = x.shape
    inv_2d = 1.0 / (2.0 * float(d))
    in_itemsize = jnp.dtype(x.dtype).itemsize

    if not diffx:
        # d/dW: wrap axis = lanes. Collapse [B,H,W] -> [B*H, W] (free reshape,
        # diff axis untouched) and tile rows only -> no halo needed.
        R = B * H
        x2 = x.reshape(R, W)
        tile_r = max(8, (_TARGET_BLOCK_BYTES // (W * 4)) // 8 * 8)
        tile_r = min(tile_r, _round_up(R, 8))
        grid = (pl.cdiv(R, tile_r),)
        kernel = functools.partial(_diff_lanes_kernel, inv_2d=inv_2d, n=W)
        out = pl.pallas_call(
            kernel,
            out_shape=jax.ShapeDtypeStruct((R, W), jnp.float32),
            grid_spec=pltpu.PrefetchScalarGridSpec(
                num_scalar_prefetch=0,
                grid=grid,
                in_specs=[pl.BlockSpec((tile_r, W), lambda r: (r, 0))],
                out_specs=pl.BlockSpec((tile_r, W), lambda r: (r, 0)),
            ),
            compiler_params=pltpu.CompilerParams(
                dimension_semantics=("parallel",),
                vmem_limit_bytes=_VMEM_LIMIT_BYTES,
            ),
            cost_estimate=pl.CostEstimate(
                flops=2 * R * W,
                transcendentals=0,
                bytes_accessed=R * W * (in_itemsize + 4),
            ),
        )(x2).reshape(B, H, W)
    else:
        # d/dH: wrap axis = sublanes, kept whole in the block; tile batch and W
        # (lane axis) in multiples of 128 so output stores stay lane-dense.
        if H * W * 4 <= _TARGET_BLOCK_BYTES or W <= 128:
            tile_w = W                     # full lane extent (always legal)
        else:
            tile_w = max(128, (_TARGET_BLOCK_BYTES // (H * 4)) // 128 * 128)
            tile_w = min(tile_w, _round_up(W, 128))
        grid = (B, pl.cdiv(W, tile_w))
        kernel = functools.partial(_diff_sublanes_kernel, inv_2d=inv_2d, n=H)
        out = pl.pallas_call(
            kernel,
            out_shape=jax.ShapeDtypeStruct((B, H, W), jnp.float32),
            grid_spec=pltpu.PrefetchScalarGridSpec(
                num_scalar_prefetch=0,
                grid=grid,
                in_specs=[pl.BlockSpec((pl.Squeezed(), H, tile_w),
                                       lambda b, w: (b, 0, w))],
                out_specs=pl.BlockSpec((pl.Squeezed(), H, tile_w),
                                       lambda b, w: (b, 0, w)),
            ),
            compiler_params=pltpu.CompilerParams(
                dimension_semantics=("parallel", "parallel"),
                vmem_limit_bytes=_VMEM_LIMIT_BYTES,
            ),
            cost_estimate=pl.CostEstimate(
                flops=2 * B * H * W,
                transcendentals=0,
                bytes_accessed=B * H * W * (in_itemsize + 4),
            ),
        )(x)

    return out[0] if unsqueezed else out


def _reference(inputs, diffx=False, d=1.0):
    """Pure-JAX reference mirroring the torch code (circular cat + [-1,0,1] conv)."""
    x = inputs
    unsqueezed = x.ndim == 2
    if unsqueezed:
        x = x[None]
    if diffx:
        x = jnp.swapaxes(x, -1, -2)
    x1 = jnp.concatenate([x[:, :, -1:], x, x[:, :, :1]], axis=2)
    res = (x1[:, :, 2:] - x1[:, :, :-2]) / (2.0 * d)
    if diffx:
        res = jnp.swapaxes(res, -1, -2)
    if unsqueezed:
        res = res[0]
    return res


if __name__ == "__main__":
    key = jax.random.PRNGKey(0)
    k1, k2, k3 = jax.random.split(key, 3)

    # 3-D input [batch, iH, iW], 2-D input [iH, iW], and a lane-dense case.
    x3 = jax.random.normal(k1, (2, 16, 16), dtype=jnp.float32)
    x2 = jax.random.normal(k2, (16, 16), dtype=jnp.float32)
    x4 = jax.random.normal(k3, (2, 64, 256), dtype=jnp.float32)

    outs = []
    for x in (x3, x2, x4):
        for diffx in (False, True):
            got = differential_op(x, diffx=diffx, d=0.5)
            want = _reference(x, diffx=diffx, d=0.5)
            got = jax.block_until_ready(got)
            assert got.shape == want.shape, (got.shape, want.shape)
            assert jnp.allclose(got, want, atol=1e-5, rtol=1e-5), (
                "mismatch", diffx, x.shape)
            outs.append(got)

    jax.block_until_ready(outs)
    print("KERNEL_OK")
</pallas_src>

<mosaic_0001>
module attributes {stable_mosaic.version = 11 : i64} {
  func.func @_diff_lanes_kernel(%arg0: i32, %arg1: memref<32x16xf32, #tpu.memory_space<vmem>>, %arg2: memref<32x16xf32, #tpu.memory_space<vmem>>) attributes {dimension_semantics = [#tpu.dimension_semantics<parallel>], iteration_bounds = array<i64: 1>, scalar_prefetch = 0 : i64, scratch_operands = 0 : i64, tpu.core_type = #tpu.core_type<tc>, window_params = [{transform_indices = @transform_0, window_bounds = array<i64: 32, 16>}, {transform_indices = @transform_1, window_bounds = array<i64: 32, 16>}]} {
    %c0 = arith.constant 0 : index
    %c0_0 = arith.constant 0 : index
    %0 = vector.load %arg1[%c0, %c0_0] : memref<32x16xf32, #tpu.memory_space<vmem>>, vector<32x16xf32>
    %c15_i32 = arith.constant 15 : i32
    %1 = tpu.dynamic_rotate %0 by %c15_i32 dim 1 : vector<32x16xf32>, i32 -> vector<32x16xf32>
    %c1_i32 = arith.constant 1 : i32
    %2 = tpu.dynamic_rotate %0 by %c1_i32 dim 1 : vector<32x16xf32>, i32 -> vector<32x16xf32>
    %3 = arith.subf %1, %2 : vector<32x16xf32>
    %cst = arith.constant 1.000000e+00 : f32
    %4 = vector.broadcast %cst : f32 to vector<32x16xf32>
    %5 = arith.mulf %3, %4 : vector<32x16xf32>
    %c0_1 = arith.constant 0 : index
    %c0_2 = arith.constant 0 : index
    %6 = vector.load %arg2[%c0_1, %c0_2] : memref<32x16xf32, #tpu.memory_space<vmem>>, vector<32x16xf32>
    tpu.vector_store %arg2[%c0_1, %c0_2], %5 {strides = array<i32>} : memref<32x16xf32, #tpu.memory_space<vmem>>, vector<32x16xf32>,
    return
  }
  func.func @transform_0(%arg0: i32) -> (i32, i32) {
    %c0_i32 = arith.constant 0 : i32
    %c0_i32_0 = arith.constant 0 : i32
    return %arg0, %c0_i32 : i32, i32
  }
  func.func @transform_1(%arg0: i32) -> (i32, i32) {
    %c0_i32 = arith.constant 0 : i32
    %c0_i32_0 = arith.constant 0 : i32
    return %arg0, %c0_i32 : i32, i32
  }
}

</mosaic_0001>

<llo_original>
// kernel: tpu_custom_call.1
$region0: #{tpu_custom_call.1}
  #allocation0 [shape = 'u32[]', space=smem, size = 0x4, offset = 0x4, fixed_abs, tag = 'smem constant byte address 0x4 - core index']
  #allocation1 [shape = 'u32[72,128]{1,0:T(1,128)}', space=vmem, size = 0x9000, scoped, tag = 'internal scratch']
  %s0 = inlined_call_operand.vmem [shape: f32[32,16], index: 0, kind: input, shape index: {}]
  %s1 = inlined_call_operand.vmem [shape: f32[32,16], index: 1, kind: output, shape index: {}]
  %s2 = sld [smem:[#allocation0]]
  $region14: #{tpu_custom_call.1} parent=0
    _
  %s4 = ssub.s32 1, %s2
  %s5 = scalar_select 0, %s4, %s2
  // Predicated region
  $region2: #{tpu_custom_call.1} parent=0 // pred_check
    _
  $region3: #{tpu_custom_call.1} parent=0 // pred_check_branch
    %7 = sbr.rel (0) target = $region5
  $region4: #{tpu_custom_call.1} parent=0 // pred_region
    _
  $region5: #{tpu_custom_call.1} parent=0 // pred_fallthru
    _
  %v8 = vld [vmem:[%s0] sm:$0xff]
  %v9 = vld [vmem:[%s0 + $0x8] sm:$0xff]
  %v10 = vld [vmem:[%s0 + $0x10] sm:$0xff]
  %v11 = vld [vmem:[%s0 + $0x18] sm:$0xff]
  %vm12 = vcmask 1047680
  %13 = vrot.lane.b32.xlu0 %v8, 16
  %v14 = vpop.permute.xlu0 %13
  %v15 = vsel %vm12, %v14, %v8
  %16 = vrot.lane.b32.xlu0 %v9, 16
  %v17 = vpop.permute.xlu0 %16
  %v18 = vsel %vm12, %v17, %v9
  %19 = vrot.lane.b32.xlu0 %v10, 16
  %v20 = vpop.permute.xlu0 %19
  %v21 = vsel %vm12, %v20, %v10
  %22 = vrot.lane.b32.xlu0 %v11, 16
  %v23 = vpop.permute.xlu0 %22
  %v24 = vsel %vm12, %v23, %v11
  %25 = vrot.lane.b32.xlu0 %v15, 16
  %v26 = vpop.permute.xlu0 %25
  %27 = vrot.lane.b32.xlu0 %v18, 16
  %v28 = vpop.permute.xlu0 %27
  %29 = vrot.lane.b32.xlu0 %v21, 16
  %v30 = vpop.permute.xlu0 %29
  %31 = vrot.lane.b32.xlu0 %v24, 16
  %v32 = vpop.permute.xlu0 %31
  %v33 = vsel %vm12, %v26, %v8
  %v34 = vsel %vm12, %v28, %v9
  %v35 = vsel %vm12, %v30, %v10
  %v36 = vsel %vm12, %v32, %v11
  %41 = vrot.lane.b32.xlu0 %v33, 114
  %v42 = vpop.permute.xlu0 %41
  %43 = vrot.lane.b32.xlu0 %v34, 114
  %v44 = vpop.permute.xlu0 %43
  %45 = vrot.lane.b32.xlu0 %v35, 114
  %v46 = vpop.permute.xlu0 %45
  %47 = vrot.lane.b32.xlu0 %v36, 114
  %v48 = vpop.permute.xlu0 %47
  %v53 = vsub.f32 %v33, %v42
  %v54 = vsub.f32 %v34, %v44
  %v55 = vsub.f32 %v35, %v46
  %v56 = vsub.f32 %v36, %v48
  %61 = vrot.lane.b32.xlu0 %v53, 127
  %v62 = vpop.permute.xlu0 %61
  %63 = vrot.lane.b32.xlu0 %v54, 127
  %v64 = vpop.permute.xlu0 %63
  %65 = vrot.lane.b32.xlu0 %v55, 127
  %v66 = vpop.permute.xlu0 %65
  %67 = vrot.lane.b32.xlu0 %v56, 127
  %v68 = vpop.permute.xlu0 %67
  %vm73 = vcmask 130048
  %74 = vst.msk [vmem:[%s1] sm:$0xff] %vm73, %v62
  %75 = vst.msk [vmem:[%s1 + $0x8] sm:$0xff] %vm73, %v64
  %76 = vst.msk [vmem:[%s1 + $0x10] sm:$0xff] %vm73, %v66
  %77 = vst.msk [vmem:[%s1 + $0x18] sm:$0xff] %vm73, %v68
  // Predicated region
  $region6: #{tpu_custom_call.1} parent=0 // pred_check
    _
  $region7: #{tpu_custom_call.1} parent=0 // pred_check_branch
    %79 = sbr.rel (0) target = $region9
  $region8: #{tpu_custom_call.1} parent=0 // pred_region
    _
  $region9: #{tpu_custom_call.1} parent=0 // pred_fallthru
    _
  // Predicated region
  $region10: #{tpu_custom_call.1} parent=0 // pred_check
    _
  $region11: #{tpu_custom_call.1} parent=0 // pred_check_branch
    %81 = sbr.rel (0) target = $region13
  $region12: #{tpu_custom_call.1} parent=0 // pred_region
    _
  $region13: #{tpu_custom_call.1} parent=0 // pred_fallthru
    _

</llo_original>
